<compile_context>
chip_gen: v5e
topology: v5e:2x2
jax: 0.10.0
libtpu: 0.0.40
codegen_flags: <defaults>
</compile_context>

<pallas_src>
import functools

import jax
import jax.numpy as jnp
from jax.experimental import pallas as pl
from jax.experimental.pallas import tpu as pltpu


def _single_layer_kernel(x_ref, w_ref, b_ref, o_ref):
    # x_ref: (bb, E) VMEM   w_ref: (1, E) VMEM   b_ref: (1, 1) SMEM   o_ref: (1, bb) VMEM
    # y^T = w_row @ x^T -> (1, bb): bb lands on lanes, so the output store is lane-dense.
    y = jax.lax.dot_general(
        w_ref[...],
        x_ref[...],
        dimension_numbers=(((1,), (1,)), ((), ())),      # contract over E on both sides
        preferred_element_type=jnp.float32,              # f32 MXU accumulation
    )
    y = y + b_ref[0, 0].astype(jnp.float32)              # scalar bias from SMEM
    o_ref[...] = jax.nn.sigmoid(y).astype(o_ref.dtype)   # activation_function (sigmoid)


def _round_up(v, m):
    return ((v + m - 1) // m) * m


def _choose_block_b(B, E, itemsize, block_b):
    """Batch tile: lane-dense multiple of 128, ~2 MiB of HBM traffic per step when
    possible, fits the lane-padded double-buffered VMEM budget, and keeps >= ~4 grid
    steps for v7x megacore when B is large enough."""
    E_pad = _round_up(max(E, 1), 128)                # lanes pad to 128 in VMEM
    TARGET_STEP_BYTES = 2 * 1024 * 1024              # x HBM bytes per grid step target
    X_TILE_VMEM_BUDGET = 24 * 1024 * 1024            # 2x (double-buffered) padded x tile

    bb = 128
    for cand in (256, 512, 1024, 2048, 4096, 8192, 16384):
        if cand > block_b:
            break
        if 2 * cand * E_pad * itemsize > X_TILE_VMEM_BUDGET:
            break
        bb = cand
        if bb * E * itemsize >= TARGET_STEP_BYTES:
            break

    # Don't over-tile tiny batches.
    bb = min(bb, _round_up(B, 128))

    # v7x megacore: keep >= ~4 parallel grid steps when each step still moves >= 1 MiB.
    quarter = _round_up(pl.cdiv(B, 4), 128)
    if quarter * E * itemsize >= (1 << 20):
        bb = min(bb, quarter)

    return bb


@functools.partial(jax.jit, static_argnames=("block_b",))
def single_layer_forward(x, w, b, *, block_b=16384):
    """y = sigmoid(x @ w + b); x: [..., E], w: [E, 1], b: [1, 1] -> [..., 1]."""
    *lead, E = x.shape
    x2 = x.reshape(-1, E)
    B = x2.shape[0]
    itemsize = x2.dtype.itemsize

    bb = _choose_block_b(B, E, itemsize, block_b)

    w_row = w.reshape(1, E).astype(x2.dtype)          # (E, 1) -> (1, E): one row of weights
    b_2d = b.reshape(1, 1).astype(jnp.float32)        # scalar bias, read from SMEM

    # Requested VMEM limit: lane-padded double-buffered x tile + slack, clamped under a
    # v7x-safe ceiling (v7x has 64 MiB physical VMEM per TensorCore vs 128 on v5e/v6e).
    E_pad = _round_up(E, 128)
    x_tile_vmem = 2 * bb * E_pad * itemsize
    vmem_limit = int(min(48 * 1024 * 1024,
                         max(32 * 1024 * 1024, x_tile_vmem + (4 << 20))))

    grid = (pl.cdiv(B, bb),)                          # no padding: Pallas masks the edge block
    out = pl.pallas_call(
        _single_layer_kernel,
        out_shape=jax.ShapeDtypeStruct((1, B), x2.dtype),
        grid_spec=pltpu.PrefetchScalarGridSpec(
            num_scalar_prefetch=0,
            grid=grid,
            in_specs=[
                pl.BlockSpec((bb, E), lambda i: (i, 0)),             # x tile (pipelined)
                pl.BlockSpec((1, E), lambda i: (0, 0)),              # weight row, fetched once
                pl.BlockSpec(memory_space=pltpu.MemorySpace.SMEM),   # bias scalar in SMEM
            ],
            out_specs=pl.BlockSpec((1, bb), lambda i: (0, i)),       # lane-dense output row
        ),
        compiler_params=pltpu.CompilerParams(
            dimension_semantics=("parallel",),    # shards the batch axis across v7x TCs
            vmem_limit_bytes=vmem_limit,
        ),
    )(x2, w_row, b_2d)

    # (1, B) -> [..., 1]
    return out.reshape(tuple(lead) + (1,))


def reference_forward(x, w, b):
    return jax.nn.sigmoid(x @ w + b)


if __name__ == "__main__":
    key = jax.random.PRNGKey(0)
    k_x, k_w, k_b = jax.random.split(key, 3)

    batch = 200            # deliberately not a multiple of the batch tile (masked edge block)
    embedding_size = 32

    # Deterministic inputs; snap to bf16-representable values so the kernel's MXU matmul
    # and the XLA reference agree tightly regardless of TPU matmul precision defaults.
    x = jax.random.normal(k_x, (batch, embedding_size), dtype=jnp.float32)
    x = x.astype(jnp.bfloat16).astype(jnp.float32)

    # Init mirroring torch.nn.Linear: U(-1/sqrt(E), 1/sqrt(E)).
    bound = 1.0 / (embedding_size ** 0.5)
    w = jax.random.uniform(
        k_w, (embedding_size, 1), minval=-bound, maxval=bound, dtype=jnp.float32
    ).astype(jnp.bfloat16).astype(jnp.float32)
    b = jax.random.uniform(
        k_b, (1, 1), minval=-bound, maxval=bound, dtype=jnp.float32
    ).astype(jnp.bfloat16).astype(jnp.float32)

    # f32 path.
    y = jax.block_until_ready(single_layer_forward(x, w, b))
    y_ref = reference_forward(x, w, b)
    assert y.shape == (batch, 1)
    assert jnp.allclose(y, y_ref, atol=1e-5, rtol=1e-5), "f32 mismatch vs reference"

    # bf16 input fast path (halves HBM input bytes); f32 accumulate/sigmoid in-kernel.
    y_bf16 = jax.block_until_ready(single_layer_forward(x.astype(jnp.bfloat16), w, b))
    assert y_bf16.shape == (batch, 1)
    assert jnp.allclose(y_bf16.astype(jnp.float32), y_ref, atol=2e-2, rtol=2e-2), \
        "bf16 mismatch vs reference"

    print("KERNEL_OK")
</pallas_src>

<mosaic_0001>
module attributes {stable_mosaic.version = 11 : i64} {
  func.func @_single_layer_kernel(%arg0: i32, %arg1: memref<256x32xf32, #tpu.memory_space<vmem>>, %arg2: memref<1x32xf32, #tpu.memory_space<vmem>>, %arg3: memref<1x1xf32, #tpu.memory_space<smem>>, %arg4: memref<1x256xf32, #tpu.memory_space<vmem>>) attributes {dimension_semantics = [#tpu.dimension_semantics<parallel>], iteration_bounds = array<i64: 1>, scalar_prefetch = 0 : i64, scratch_operands = 0 : i64, tpu.core_type = #tpu.core_type<tc>, window_params = [{transform_indices = @transform_0, window_bounds = array<i64: 256, 32>}, {pipeline_mode = #tpu.pipeline_mode<synchronous>, transform_indices = @transform_1, window_bounds = array<i64: 1, 32>}, {transform_indices = @transform_2, window_bounds = array<i64: 1, 1>}, {transform_indices = @transform_3, window_bounds = array<i64: 1, 256>}]} {
    %c0 = arith.constant 0 : index
    %c0_0 = arith.constant 0 : index
    %0 = vector.load %arg2[%c0, %c0_0] : memref<1x32xf32, #tpu.memory_space<vmem>>, vector<1x32xf32>
    %c0_1 = arith.constant 0 : index
    %c0_2 = arith.constant 0 : index
    %1 = vector.load %arg1[%c0_1, %c0_2] : memref<256x32xf32, #tpu.memory_space<vmem>>, vector<256x32xf32>
    %cst = arith.constant dense<0.000000e+00> : vector<1x256xf32>
    %2 = tpu.matmul %0, %1, %cst {dimension_numbers = #tpu.dot_dimension_numbers<[1], [1], [0], [0], [0, 0, 1, 0], [], []>} : vector<1x32xf32>, vector<256x32xf32>, vector<1x256xf32> -> vector<1x256xf32>
    %c0_3 = arith.constant 0 : index
    %c0_4 = arith.constant 0 : index
    %3 = memref.load %arg3[%c0_3, %c0_4] : memref<1x1xf32, #tpu.memory_space<smem>>
    %4 = vector.broadcast %3 : f32 to vector<1x256xf32>
    %5 = arith.addf %2, %4 : vector<1x256xf32>
    %6 = arith.negf %5 : vector<1x256xf32>
    %7 = math.exp %6 : vector<1x256xf32>
    %cst_5 = arith.constant 1.000000e+00 : f32
    %8 = vector.broadcast %cst_5 : f32 to vector<1x256xf32>
    %9 = arith.addf %8, %7 : vector<1x256xf32>
    %10 = arith.divf %8, %9 : vector<1x256xf32>
    %c0_6 = arith.constant 0 : index
    %c0_7 = arith.constant 0 : index
    %11 = vector.load %arg4[%c0_6, %c0_7] : memref<1x256xf32, #tpu.memory_space<vmem>>, vector<1x256xf32>
    tpu.vector_store %arg4[%c0_6, %c0_7], %10 {strides = array<i32>} : memref<1x256xf32, #tpu.memory_space<vmem>>, vector<1x256xf32>,
    return
  }
  func.func @transform_0(%arg0: i32) -> (i32, i32) {
    %c0_i32 = arith.constant 0 : i32
    %c0_i32_0 = arith.constant 0 : i32
    return %arg0, %c0_i32 : i32, i32
  }
  func.func @transform_1(%arg0: i32) -> (i32, i32) {
    %c0_i32 = arith.constant 0 : i32
    %c0_i32_0 = arith.constant 0 : i32
    %c0_i32_1 = arith.constant 0 : i32
    return %c0_i32, %c0_i32_0 : i32, i32
  }
  func.func @transform_2(%arg0: i32) -> (i32, i32) {
    %c0_i32 = arith.constant 0 : i32
    %c0_i32_0 = arith.constant 0 : i32
    %c0_i32_1 = arith.constant 0 : i32
    return %c0_i32, %c0_i32_0 : i32, i32
  }
  func.func @transform_3(%arg0: i32) -> (i32, i32) {
    %c0_i32 = arith.constant 0 : i32
    %c0_i32_0 = arith.constant 0 : i32
    return %c0_i32, %arg0 : i32, i32
  }
}

</mosaic_0001>

<llo_original>
// kernel: single_layer_forward.1
$region0: #{single_layer_forward.1}
  #allocation0 [shape = 'u32[]', space=smem, size = 0x4, offset = 0x4, fixed_abs, tag = 'smem constant byte address 0x4 - core index']
  #allocation1 [shape = 'u32[72,128]{1,0:T(1,128)}', space=vmem, size = 0x9000, scoped, tag = 'internal scratch']
  #allocation2 [shape = 'f32[1,1]{1,0:T(1,128)S(6)}', space=smem, size = 0x200, scoped, tag = 'scoped memory for single_layer_forward.1']
  %s0 = inlined_call_operand.vmem [shape: f32[200,32], index: 0, kind: input, shape index: {}]
  %s1 = inlined_call_operand.vmem [shape: f32[1,32], index: 1, kind: input, shape index: {}]
  %s2 = inlined_call_operand.<no memory space> [shape: f32[1,1], index: 2, kind: input, shape index: {}]
  %s3 = inlined_call_operand.hbm [shape: f32[1,200], index: 3, kind: output, shape index: {}]
  %s4 = sld [smem:[#allocation0]]
  $region22: #{single_layer_forward.1} parent=0
    _
  %s6 = ssub.s32 1, %s4
  %s7 = scalar_select 0, %s6, %s4
  %8 = sst [smem:[#allocation2]] %s2
  $region1: #{single_layer_forward.1} parent=0
    #allocation3 [shape = 'u8[1024]{0}', space=vmem, size = 0x400, scoped, tag = 'output window, operand 0, single buffered']
    #allocation4 [shape = 's32[1]{0}', space=sflag, size = 0x4, scoped, tag = 'scoped memory for single_layer_forward.1']
    %9 = vsyncpa [#allocation4], 0
    // Predicated region
    $region2: #{single_layer_forward.1} parent=1 // pred_check
      _
    $region3: #{single_layer_forward.1} parent=1 // pred_check_branch
      %11 = sbr.rel (0) target = $region5
    $region4: #{single_layer_forward.1} parent=1 // pred_region
      _
    $region5: #{single_layer_forward.1} parent=1 // pred_fallthru
      _
    // Predicated region
    $region6: #{single_layer_forward.1} parent=1 // pred_check
      _
    $region7: #{single_layer_forward.1} parent=1 // pred_check_branch
      %13 = sbr.rel (0) target = $region9
    $region8: #{single_layer_forward.1} parent=1 // pred_region
      _
    $region9: #{single_layer_forward.1} parent=1 // pred_fallthru
      _
    // Predicated region
    $region10: #{single_layer_forward.1} parent=1 // pred_check
      _
    $region11: #{single_layer_forward.1} parent=1 // pred_check_branch
      %15 = sbr.rel (0) target = $region13
    $region12: #{single_layer_forward.1} parent=1 // pred_region
      _
    $region13: #{single_layer_forward.1} parent=1 // pred_fallthru
      _
    %v16 = vld [vmem:[%s1] sm:$0x1]
    %v17 = vld [vmem:[%s0] sm:$0xff]
    %v18 = vld [vmem:[%s0 + $0x8] sm:$0xff]
    %v19 = vld [vmem:[%s0 + $0x10] sm:$0xff]
    %v20 = vld [vmem:[%s0 + $0x18] sm:$0xff]
    %v21 = vld [vmem:[%s0 + $0x20] sm:$0xff]
    %v22 = vld [vmem:[%s0 + $0x28] sm:$0xff]
    %v23 = vld [vmem:[%s0 + $0x30] sm:$0xff]
    %v24 = vld [vmem:[%s0 + $0x38] sm:$0xff]
    %v25 = vld [vmem:[%s0 + $0x40] sm:$0xff]
    %v26 = vld [vmem:[%s0 + $0x48] sm:$0xff]
    %v27 = vld [vmem:[%s0 + $0x50] sm:$0xff]
    %v28 = vld [vmem:[%s0 + $0x58] sm:$0xff]
    %v29 = vld [vmem:[%s0 + $0x60] sm:$0xff]
    %v30 = vld [vmem:[%s0 + $0x68] sm:$0xff]
    %v31 = vld [vmem:[%s0 + $0x70] sm:$0xff]
    %v32 = vld [vmem:[%s0 + $0x78] sm:$0xff]
    %v33 = vld [vmem:[%s0 + $0x80] sm:$0xff]
    %v34 = vld [vmem:[%s0 + $0x88] sm:$0xff]
    %v35 = vld [vmem:[%s0 + $0x90] sm:$0xff]
    %v36 = vld [vmem:[%s0 + $0x98] sm:$0xff]
    %v37 = vld [vmem:[%s0 + $0xa0] sm:$0xff]
    %v38 = vld [vmem:[%s0 + $0xa8] sm:$0xff]
    %v39 = vld [vmem:[%s0 + $0xb0] sm:$0xff]
    %v40 = vld [vmem:[%s0 + $0xb8] sm:$0xff]
    %v41 = vld [vmem:[%s0 + $0xc0] sm:$0xff]
    %v42 = vld [vmem:[%s0 + $0xc8] sm:$0xff]
    %v43 = vld [vmem:[%s0 + $0xd0] sm:$0xff]
    %v44 = vld [vmem:[%s0 + $0xd8] sm:$0xff]
    %v45 = vld [vmem:[%s0 + $0xe0] sm:$0xff]
    %v46 = vld [vmem:[%s0 + $0xe8] sm:$0xff]
    %v47 = vld [vmem:[%s0 + $0xf0] sm:$0xff]
    %v48 = vld [vmem:[%s0 + $0xf8] sm:$0xff]
    %s49 = sld [smem:[#allocation2]]
    %v50 = vstv %s49
    %vm51 = vcmask 261120
    %v53 = vsel %vm51, %v16, 0
    %v56 = vsel %vm51, %v17, 0
    %v59 = vsel %vm51, %v18, 0
    %v62 = vsel %vm51, %v19, 0
    %v65 = vsel %vm51, %v20, 0
    %v68 = vsel %vm51, %v21, 0
    %v71 = vsel %vm51, %v22, 0
    %v74 = vsel %vm51, %v23, 0
    %v77 = vsel %vm51, %v24, 0
    %v80 = vsel %vm51, %v25, 0
    %v83 = vsel %vm51, %v26, 0
    %v86 = vsel %vm51, %v27, 0
    %v89 = vsel %vm51, %v28, 0
    %v92 = vsel %vm51, %v29, 0
    %v95 = vsel %vm51, %v30, 0
    %v98 = vsel %vm51, %v31, 0
    %v101 = vsel %vm51, %v32, 0
    %v104 = vsel %vm51, %v33, 0
    %v107 = vsel %vm51, %v34, 0
    %v110 = vsel %vm51, %v35, 0
    %v113 = vsel %vm51, %v36, 0
    %v116 = vsel %vm51, %v37, 0
    %v119 = vsel %vm51, %v38, 0
    %v122 = vsel %vm51, %v39, 0
    %v125 = vsel %vm51, %v40, 0
    %v128 = vsel %vm51, %v41, 0
    %v131 = vsel %vm51, %v42, 0
    %v134 = vsel %vm51, %v43, 0
    %v137 = vsel %vm51, %v44, 0
    %v140 = vsel %vm51, %v45, 0
    %v143 = vsel %vm51, %v46, 0
    %v146 = vsel %vm51, %v47, 0
    %v149 = vsel %vm51, %v48, 0
    %151 = vmatpush.xpose.msra.mxu0 %v101
    %152 = vmatpush.xpose.msra.mxu0 %v98
    %153 = vmatpush.xpose.msra.mxu0 %v95
    %154 = vmatpush.xpose.msra.mxu0 %v92
    %155 = vmatpush.xpose.msra.mxu0 %v89
    %156 = vmatpush.xpose.msra.mxu0 %v86
    %157 = vmatpush.xpose.msra.mxu0 %v83
    %158 = vmatpush.xpose.msra.mxu0 %v80
    %159 = vmatpush.xpose.msra.mxu0 %v77
    %160 = vmatpush.xpose.msra.mxu0 %v74
    %161 = vmatpush.xpose.msra.mxu0 %v71
    %162 = vmatpush.xpose.msra.mxu0 %v68
    %163 = vmatpush.xpose.msra.mxu0 %v65
    %164 = vmatpush.xpose.msra.mxu0 %v62
    %165 = vmatpush.xpose.msra.mxu0 %v59
    %166 = vmatpush.xpose.msra.mxu0 %v56
    %167 = vmatmul.f32.gmra.mxu0 %v53
    %v168 = vpop.f32.mrf.mxu0
    %v169 = vadd.f32 %v50, %v168
    %170 = vdwg.mxu0
    %171 = vmatpush.xpose.msra.mxu0 %v149
    %172 = vmatpush.xpose.msra.mxu0 %v146
    %173 = vmatpush.xpose.msra.mxu0 %v143
    %174 = vmatpush.xpose.msra.mxu0 %v140
    %175 = vmatpush.xpose.msra.mxu0 %v137
    %176 = vmatpush.xpose.msra.mxu0 %v134
    %177 = vmatpush.xpose.msra.mxu0 %v131
    %178 = vmatpush.xpose.msra.mxu0 %v128
    %179 = vmatpush.xpose.msra.mxu0 %v125
    %180 = vmatpush.xpose.msra.mxu0 %v122
    %181 = vmatpush.xpose.msra.mxu0 %v119
    %182 = vmatpush.xpose.msra.mxu0 %v116
    %183 = vmatpush.xpose.msra.mxu0 %v113
    %184 = vmatpush.xpose.msra.mxu0 %v110
    %185 = vmatpush.xpose.msra.mxu0 %v107
    %186 = vmatpush.xpose.msra.mxu0 %v104
    %187 = vmatmul.f32.gmra.mxu0 %v53
    %v188 = vpop.f32.mrf.mxu0
    %v189 = vadd.f32 %v50, %v188
    %190 = vdwg.mxu0
    %v191 = vxor.u32 %v169, 2147483648
    %v192 = vxor.u32 %v189, 2147483648
    %v193 = vmul.f32 %v191, 1.442695
    %v194 = vpow.pop %v193
    %v195 = vmul.f32 %v192, 1.442695
    %v196 = vpow.pop %v195
    %v197 = vadd.f32 %v194, 1.0
    %v198 = vadd.f32 %v196, 1.0
    %v199 = vrcp.pop %v197
    %v200 = vmul.f32 %v197, %v199
    %v201 = vsub.f32 1.0, %v200
    %v202 = vmul.f32 %v199, %v201
    %v203 = vadd.f32 %v199, %v202
    %vm204 = vweird.f32 %v197
    %vm205 = vweird.f32 %v199
    %vm206 = vmor %vm204, %vm205
    %v207 = vsel %vm206, %v199, %v203
    %v208 = vand.u32 2147483647, %v197
    %vm209 = vcmp.eq.f32.partialorder %v208, 8.507059e+37
    %v210 = vand.u32 %v197, 2147483648
    %v211 = vor.u32 1.1754944e-38, %v210
    %v212 = vsel %vm209, %v211, %v207
    %v213 = vmul.f32 1.0, %v212
    %v214 = vrcp.pop %v198
    %v215 = vmul.f32 %v198, %v214
    %v216 = vsub.f32 1.0, %v215
    %v217 = vmul.f32 %v214, %v216
    %v218 = vadd.f32 %v214, %v217
    %vm219 = vweird.f32 %v198
    %vm220 = vweird.f32 %v214
    %vm221 = vmor %vm219, %vm220
    %v222 = vsel %vm221, %v214, %v218
    %v223 = vand.u32 2147483647, %v198
    %vm224 = vcmp.eq.f32.partialorder %v223, 8.507059e+37
    %v225 = vand.u32 %v198, 2147483648
    %v226 = vor.u32 1.1754944e-38, %v225
    %v227 = vsel %vm224, %v226, %v222
    %v228 = vmul.f32 1.0, %v227
    %v231 = vrot.slane %v228, 7
    %vm232 = vcmask 1040384
    %v233 = vsel %vm232, %v213, %v231
    %v235 = vlaneseq
    %vm236 = vcmp.ge.s32.totalorder %v235, 0
    %vm237 = vcmp.lt.s32.totalorder %v235, 256
    %vm238 = vmand %vm236, %vm237
    %239 = vst.msk [vmem:[#allocation3] sm:$0x3] %vm238, %v233
    // Predicated region
    $region14: #{single_layer_forward.1} parent=1 // pred_check
      _
    $region15: #{single_layer_forward.1} parent=1 // pred_check_branch
      %241 = sbr.rel (0) target = $region17
    $region16: #{single_layer_forward.1} parent=1 // pred_region
      %243 = vsyncadd [#allocation4], 0
      %s245 = sshll.u32 [#allocation3], 4
      %s246 = int_to_ptr.vmem [resolvable:$true] %s245
      %s247 = sshll.u32 %s3, 4
      %s248 = int_to_ptr.hbm [resolvable:$true] %s247
      %250 = dma.vmem_to_hbm [thread:$0]  %s246, 32, %s248, [#allocation4]
    $region17: #{single_layer_forward.1} parent=1 // pred_fallthru
      _
    // Predicated region
    $region18: #{single_layer_forward.1} parent=1 // pred_check
      _
    $region19: #{single_layer_forward.1} parent=1 // pred_check_branch
      %252 = sbr.rel (0) target = $region21
    $region20: #{single_layer_forward.1} parent=1 // pred_region
      %254 = dma.done [#allocation4], 32
    $region21: #{single_layer_forward.1} parent=1 // pred_fallthru
      _
    %255 = vsyncpa [#allocation4], 1

</llo_original>
